<compile_context>
chip_gen: v7x
topology: tpu7x:2x2x1
jax: 0.10.0
libtpu: 0.0.40
codegen_flags: <defaults>
</compile_context>

<pallas_src>
import math

import jax
import jax.numpy as jnp
from jax import lax
from jax.experimental import pallas as pl
from jax.experimental.pallas import tpu as pltpu


def _round_up(n, m):
    return ((n + m - 1) // m) * m


def _cdiv(a, b):
    return (a + b - 1) // b


def _footprint_bytes(tb, tk, hid, x_isz, w_isz):
    """Conservative per-TensorCore VMEM footprint estimate (bytes)."""
    x_tiles = 2 * tb * tk * x_isz          # double-buffered activation tiles
    w_tiles = 2 * tk * hid * w_isz         # double-buffered weight tiles
    vecs = 2 * 2 * hid * 4                 # b1 + w2 rows (worst case 2 bufs)
    out = 2 * tb * 4                       # lane-dense output tile
    acc = tb * hid * 4                     # f32 accumulator scratch
    return x_tiles + w_tiles + vecs + out + acc


def _select_tiles(B, D, hid, x_isz, w_isz, budget):
    """Pick (TB, TK).

    Prefer keeping w1 fully resident (TK == D) so the weight is streamed from
    HBM exactly once; otherwise K-tile with a large batch tile to amortize the
    per-batch-tile w1 re-stream.
    """
    # MXU-friendly batch tile (multiple of 128 once B is large enough).
    if B >= 128:
        TB = min(512, _round_up(min(B, 512), 128))
    else:
        TB = _round_up(B, 8)

    # 1) Full-D residency: w1 block index is constant over the whole grid.
    for tb in dict.fromkeys((TB, 256, 128)):
        if tb > TB:
            continue
        if _footprint_bytes(tb, D, hid, x_isz, w_isz) <= budget:
            # Small-batch megacore: if the whole batch fits in one tile, split
            # it in two so both v7x TensorCores get work.  w1 is resident, so
            # the extra batch tile only costs per-step overhead (~0.35 us).
            if B >= 256 and _cdiv(B, tb) == 1:
                tb = _round_up(_cdiv(B, 2), 128)
            return tb, D

    # 2) K-tiled path: keep the batch tile large so w1 is re-streamed as few
    #    times as possible; never drop TK below 512 (keeps the MXU fed, v5e).
    if B >= 512:
        TB = 512
    for tk in (4096, 2048, 1024, 512):
        if tk < D and _footprint_bytes(TB, tk, hid, x_isz, w_isz) <= budget:
            return TB, tk
    return TB, min(512, D)


def _make_kernel(D, TK, compute_dtype, ragged):
    def kernel(x_ref, w1_ref, b1_ref, w2_ref, b2_ref, o_ref, h_acc):
        k = pl.program_id(1)

        @pl.when(k == 0)
        def _init():
            h_acc[...] = jnp.zeros_like(h_acc)

        xt = x_ref[...]
        wt = w1_ref[...]
        if ragged:
            # The last K tile reads past D; out-of-bounds data is unspecified
            # (could be NaN/Inf), so zero BOTH operands' out-of-range slots so
            # they contribute exactly nothing to the accumulator.
            base = k * TK
            col = base + lax.broadcasted_iota(jnp.int32, (1, TK), 1)
            row = base + lax.broadcasted_iota(jnp.int32, (TK, 1), 0)
            xt = jnp.where(col < D, xt, 0.0)
            wt = jnp.where(row < D, wt, 0.0)

        # Layer-1 partial contraction on the MXU (bf16 operands by default,
        # f32 accumulation).  Casting the tile *here* instead of in the
        # wrapper keeps the HBM x stream single-pass.
        h_acc[...] += jnp.dot(
            xt.astype(compute_dtype), wt.astype(compute_dtype),
            preferred_element_type=jnp.float32)

        @pl.when(k == pl.num_programs(1) - 1)
        def _finalize():
            # Bias + ReLU on the VPU (f32).
            h = jnp.maximum(h_acc[...] + b1_ref[...].astype(jnp.float32), 0.0)
            # Width-1 second Linear as a tiny (1, Hid) x (Hid, TB) contraction
            # whose result already has the batch dimension on lanes, so the
            # store below is a lane-dense, unmasked vst (no sublane->lane
            # relayout needed).  Finalize-only, off the K critical path.
            o = jnp.einsum("oh,bh->ob", w2_ref[...].astype(jnp.float32), h,
                           preferred_element_type=jnp.float32)
            o_ref[...] = (o + b2_ref[0, 0]).astype(o_ref.dtype)

    return kernel


def v_forward(x, w1, b1, w2_row, b2, *, compute_dtype=jnp.bfloat16):
    """Forward pass of V(MLP): flatten -> Linear -> ReLU -> Linear(out=1).

    x:      (B, C, H, W)  (any float dtype; tiles cast to compute_dtype in-kernel)
    w1:     (D, Hid)  -- transpose of PyTorch l1.weight
    b1:     (1, Hid)
    w2_row: (1, Hid)  -- same layout as PyTorch l2.weight
    b2:     (1, 1)
    Returns (B, 1) float32.
    """
    B = x.shape[0]
    x2d = x.reshape(B, -1)                 # torch.flatten(x, 1, -1); no copy
    D = x2d.shape[1]
    hid = w1.shape[1]
    assert w1.shape[0] == D and b1.shape == (1, hid) and w2_row.shape == (1, hid)

    # Generation-aware VMEM budget (v7x: 64 MiB/TC, v5e/v6e: 128 MiB).
    try:
        vmem_cap = int(pltpu.get_tpu_info().vmem_capacity_bytes)
    except Exception:
        vmem_cap = 64 << 20                # conservative v7x per-TC default
    budget = int(vmem_cap * 0.75)

    x_isz = jnp.dtype(x2d.dtype).itemsize
    w_isz = jnp.dtype(w1.dtype).itemsize
    TB, TK = _select_tiles(B, D, hid, x_isz, w_isz, budget)
    grid_b = _cdiv(B, TB)
    grid_k = _cdiv(D, TK)
    ragged = (D % TK) != 0

    est = _footprint_bytes(TB, TK, hid, x_isz, w_isz) + (4 << 20)
    vmem_limit = int(min(max(est, 16 << 20), int(vmem_cap * 0.9)))

    kernel = _make_kernel(D, TK, compute_dtype, ragged)

    grid_spec = pltpu.PrefetchScalarGridSpec(
        num_scalar_prefetch=0,
        grid=(grid_b, grid_k),
        in_specs=[
            # x tile, streamed (double-buffered) over both grid axes.
            pl.BlockSpec((TB, TK), lambda i, k: (i, k)),
            # w1 tile: constant block index when TK == D => fetched from HBM
            # exactly once; otherwise streamed along K only.
            pl.BlockSpec((TK, hid), lambda i, k: (k, 0)),
            pl.BlockSpec((1, hid), lambda i, k: (0, 0)),        # b1 (resident)
            pl.BlockSpec((1, hid), lambda i, k: (0, 0)),        # w2 row (resident)
            pl.BlockSpec((1, 1), lambda i, k: (0, 0),
                         memory_space=pltpu.MemorySpace.SMEM),  # b2 scalar
        ],
        # Lane-dense output: batch dimension on lanes, one (1, TB) unmasked
        # store per batch tile.  Wrapper reshapes back to (B, 1).
        out_specs=pl.BlockSpec((1, TB), lambda i, k: (0, i)),
        scratch_shapes=[pltpu.VMEM((TB, hid), jnp.float32)],
    )

    out = pl.pallas_call(
        kernel,
        out_shape=jax.ShapeDtypeStruct((1, grid_b * TB), jnp.float32),
        grid_spec=grid_spec,
        compiler_params=pltpu.CompilerParams(
            dimension_semantics=("parallel", "arbitrary"),
            vmem_limit_bytes=vmem_limit,
        ),
    )(x2d, w1, b1, w2_row, b2)

    # Padded batch-tile rows (B % TB != 0) hold unspecified values; the math
    # is row-independent so they never contaminate valid rows and are dropped
    # here.  (Keep it that way if this kernel is ever extended.)
    return out.reshape(-1)[:B].reshape(B, 1)


def init_params(key, input_dim, n_hidden):
    """Deterministic init matching nn.Linear's uniform(-1/sqrt(fan_in), +1/sqrt(fan_in))."""
    k1, k2, k3, k4 = jax.random.split(key, 4)
    bound1 = 1.0 / math.sqrt(input_dim)
    bound2 = 1.0 / math.sqrt(n_hidden)
    # w1 stored as (in_features, out_features) = transpose of PyTorch layout.
    w1 = jax.random.uniform(k1, (input_dim, n_hidden), jnp.float32, -bound1, bound1)
    b1 = jax.random.uniform(k2, (1, n_hidden), jnp.float32, -bound1, bound1)
    # w2 stored as a (1, Hid) row — identical to PyTorch l2.weight layout.
    w2 = jax.random.uniform(k3, (1, n_hidden), jnp.float32, -bound2, bound2)
    b2 = jax.random.uniform(k4, (1, 1), jnp.float32, -bound2, bound2)
    return w1, b1, w2, b2


if __name__ == "__main__":
    key = jax.random.PRNGKey(0)
    k_x, k_p, k_x2, k_p2 = jax.random.split(key, 4)

    # Small shapes consistent with the module: NCHW input flattened to input_dim.
    B, C, H, W = 2, 4, 16, 16
    input_dim = C * H * W          # 1024
    n_hidden = 128                 # small stand-in for the default 512

    x = jax.random.normal(k_x, (B, C, H, W), jnp.float32)
    w1, b1, w2, b2 = init_params(k_p, input_dim, n_hidden)

    # Pure-JAX reference (f32).
    x2d = x.reshape(B, -1)
    ref = jnp.maximum(x2d @ w1 + b1, 0.0) @ w2.T + b2

    # f32-operand path: tight tolerance check.
    out_f32 = jax.block_until_ready(
        v_forward(x, w1, b1, w2, b2, compute_dtype=jnp.float32))
    assert out_f32.shape == (B, 1)
    assert jnp.allclose(out_f32, ref, atol=1e-4, rtol=1e-4), "f32 mismatch vs JAX reference"

    # Default bf16-operand / f32-accumulate path: looser tolerance.
    out_bf16 = jax.block_until_ready(v_forward(x, w1, b1, w2, b2))
    assert out_bf16.shape == (B, 1)
    assert jnp.allclose(out_bf16, ref, atol=2e-2, rtol=2e-2), "bf16 mismatch vs JAX reference"

    # Mid-size check: exercises >1 batch tile, the lane-dense padded output
    # path, and the module's default n_hidden=512.
    B2, n_hidden2 = 300, 512
    x_big = jax.random.normal(k_x2, (B2, C, H, W), jnp.float32)
    w1b, b1b, w2b, b2b = init_params(k_p2, input_dim, n_hidden2)
    refb = jnp.maximum(x_big.reshape(B2, -1) @ w1b + b1b, 0.0) @ w2b.T + b2b
    outb = jax.block_until_ready(v_forward(x_big, w1b, b1b, w2b, b2b))
    assert outb.shape == (B2, 1)
    assert jnp.allclose(outb, refb, atol=2e-2, rtol=2e-2), "mid-size mismatch vs JAX reference"

    print("KERNEL_OK")
</pallas_src>

<mosaic_0001>
module attributes {stable_mosaic.version = 11 : i64} {
  func.func @kernel(%arg0: i32, %arg1: i32, %arg2: memref<8x1024xf32, #tpu.memory_space<vmem>>, %arg3: memref<1024x128xf32, #tpu.memory_space<vmem>>, %arg4: memref<1x128xf32, #tpu.memory_space<vmem>>, %arg5: memref<1x128xf32, #tpu.memory_space<vmem>>, %arg6: memref<1x1xf32, #tpu.memory_space<smem>>, %arg7: memref<1x8xf32, #tpu.memory_space<vmem>>, %arg8: memref<8x128xf32, #tpu.memory_space<vmem>>) attributes {dimension_semantics = [#tpu.dimension_semantics<parallel>, #tpu.dimension_semantics<arbitrary>], iteration_bounds = array<i64: 1, 1>, scalar_prefetch = 0 : i64, scratch_operands = 1 : i64, tpu.core_type = #tpu.core_type<tc>, window_params = [{transform_indices = @transform_0, window_bounds = array<i64: 8, 1024>}, {transform_indices = @transform_1, window_bounds = array<i64: 1024, 128>}, {pipeline_mode = #tpu.pipeline_mode<synchronous>, transform_indices = @transform_2, window_bounds = array<i64: 1, 128>}, {pipeline_mode = #tpu.pipeline_mode<synchronous>, transform_indices = @transform_3, window_bounds = array<i64: 1, 128>}, {transform_indices = @transform_4, window_bounds = array<i64: 1, 1>}, {transform_indices = @transform_5, window_bounds = array<i64: 1, 8>}]} {
    %c0_i32 = arith.constant 0 : i32
    %0 = arith.cmpi eq, %arg1, %c0_i32 : i32
    %1 = arith.extui %0 : i1 to i32
    %c0_i32_0 = arith.constant 0 : i32
    %2 = arith.cmpi ne, %1, %c0_i32_0 : i32
    scf.if %2 {
      %cst_10 = arith.constant 0.000000e+00 : f32
      %12 = vector.broadcast %cst_10 : f32 to vector<8x128xf32>
      %c0_11 = arith.constant 0 : index
      %c0_12 = arith.constant 0 : index
      %13 = vector.load %arg8[%c0_11, %c0_12] : memref<8x128xf32, #tpu.memory_space<vmem>>, vector<8x128xf32>
      tpu.vector_store %arg8[%c0_11, %c0_12], %12 {strides = array<i32>} : memref<8x128xf32, #tpu.memory_space<vmem>>, vector<8x128xf32>,
    } else {
    }
    %c0 = arith.constant 0 : index
    %c0_1 = arith.constant 0 : index
    %3 = vector.load %arg2[%c0, %c0_1] : memref<8x1024xf32, #tpu.memory_space<vmem>>, vector<8x1024xf32>
    %c0_2 = arith.constant 0 : index
    %c0_3 = arith.constant 0 : index
    %4 = vector.load %arg3[%c0_2, %c0_3] : memref<1024x128xf32, #tpu.memory_space<vmem>>, vector<1024x128xf32>
    %c0_4 = arith.constant 0 : index
    %c0_5 = arith.constant 0 : index
    %5 = vector.load %arg8[%c0_4, %c0_5] : memref<8x128xf32, #tpu.memory_space<vmem>>, vector<8x128xf32>
    %cst = arith.constant dense<0.000000e+00> : vector<8x128xf32>
    %6 = tpu.matmul %3, %4, %cst {dimension_numbers = #tpu.dot_dimension_numbers<[1], [0], [0], [1], [0, 0, 1, 1], [], []>} : vector<8x1024xf32>, vector<1024x128xf32>, vector<8x128xf32> -> vector<8x128xf32>
    %7 = arith.addf %5, %6 : vector<8x128xf32>
    %c0_6 = arith.constant 0 : index
    %c0_7 = arith.constant 0 : index
    %8 = vector.load %arg8[%c0_6, %c0_7] : memref<8x128xf32, #tpu.memory_space<vmem>>, vector<8x128xf32>
    tpu.vector_store %arg8[%c0_6, %c0_7], %7 {strides = array<i32>} : memref<8x128xf32, #tpu.memory_space<vmem>>, vector<8x128xf32>,
    %c0_i32_8 = arith.constant 0 : i32
    %9 = arith.cmpi eq, %arg1, %c0_i32_8 : i32
    %10 = arith.extui %9 : i1 to i32
    %c0_i32_9 = arith.constant 0 : i32
    %11 = arith.cmpi ne, %10, %c0_i32_9 : i32
    scf.if %11 {
      %c0_10 = arith.constant 0 : index
      %c0_11 = arith.constant 0 : index
      %12 = vector.load %arg8[%c0_10, %c0_11] : memref<8x128xf32, #tpu.memory_space<vmem>>, vector<8x128xf32>
      %c0_12 = arith.constant 0 : index
      %c0_13 = arith.constant 0 : index
      %13 = vector.load %arg4[%c0_12, %c0_13] : memref<1x128xf32, #tpu.memory_space<vmem>>, vector<1x128xf32>
      %14 = vector.broadcast %13 : vector<1x128xf32> to vector<8x128xf32>
      %15 = arith.addf %12, %14 : vector<8x128xf32>
      %cst_14 = arith.constant 0.000000e+00 : f32
      %16 = vector.broadcast %cst_14 : f32 to vector<8x128xf32>
      %17 = arith.maximumf %15, %16 : vector<8x128xf32>
      %c0_15 = arith.constant 0 : index
      %c0_16 = arith.constant 0 : index
      %18 = vector.load %arg5[%c0_15, %c0_16] : memref<1x128xf32, #tpu.memory_space<vmem>>, vector<1x128xf32>
      "tpu.trace_start"() <{level = 10 : i32, message = "oh,bh->ob"}> : () -> ()
      %cst_17 = arith.constant dense<0.000000e+00> : vector<1x8xf32>
      %19 = tpu.matmul %18, %17, %cst_17 {dimension_numbers = #tpu.dot_dimension_numbers<[1], [1], [0], [0], [0, 0, 1, 0], [], []>} : vector<1x128xf32>, vector<8x128xf32>, vector<1x8xf32> -> vector<1x8xf32>
      "tpu.trace_stop"() : () -> ()
      %c0_18 = arith.constant 0 : index
      %c0_19 = arith.constant 0 : index
      %20 = memref.load %arg6[%c0_18, %c0_19] : memref<1x1xf32, #tpu.memory_space<smem>>
      %21 = vector.broadcast %20 : f32 to vector<1x8xf32>
      %22 = arith.addf %19, %21 : vector<1x8xf32>
      %c0_20 = arith.constant 0 : index
      %c0_21 = arith.constant 0 : index
      %23 = vector.load %arg7[%c0_20, %c0_21] : memref<1x8xf32, #tpu.memory_space<vmem>>, vector<1x8xf32>
      tpu.vector_store %arg7[%c0_20, %c0_21], %22 {strides = array<i32>} : memref<1x8xf32, #tpu.memory_space<vmem>>, vector<1x8xf32>,
    } else {
    }
    return
  }
  func.func @transform_0(%arg0: i32, %arg1: i32) -> (i32, i32) {
    %c0_i32 = arith.constant 0 : i32
    return %arg0, %arg1 : i32, i32
  }
  func.func @transform_1(%arg0: i32, %arg1: i32) -> (i32, i32) {
    %c0_i32 = arith.constant 0 : i32
    %c0_i32_0 = arith.constant 0 : i32
    return %arg1, %c0_i32 : i32, i32
  }
  func.func @transform_2(%arg0: i32, %arg1: i32) -> (i32, i32) {
    %c0_i32 = arith.constant 0 : i32
    %c0_i32_0 = arith.constant 0 : i32
    %c0_i32_1 = arith.constant 0 : i32
    return %c0_i32, %c0_i32_0 : i32, i32
  }
  func.func @transform_3(%arg0: i32, %arg1: i32) -> (i32, i32) {
    %c0_i32 = arith.constant 0 : i32
    %c0_i32_0 = arith.constant 0 : i32
    %c0_i32_1 = arith.constant 0 : i32
    return %c0_i32, %c0_i32_0 : i32, i32
  }
  func.func @transform_4(%arg0: i32, %arg1: i32) -> (i32, i32) {
    %c0_i32 = arith.constant 0 : i32
    %c0_i32_0 = arith.constant 0 : i32
    %c0_i32_1 = arith.constant 0 : i32
    return %c0_i32, %c0_i32_0 : i32, i32
  }
  func.func @transform_5(%arg0: i32, %arg1: i32) -> (i32, i32) {
    %c0_i32 = arith.constant 0 : i32
    %c0_i32_0 = arith.constant 0 : i32
    return %c0_i32, %arg0 : i32, i32
  }
}

</mosaic_0001>

<llo_original>
// kernel: tpu_custom_call.1
$region0: #{tpu_custom_call.1}
  #allocation0 [shape = 'u32[]', space=smem, size = 0x4, offset = 0x4, fixed_abs, tag = 'smem constant byte address 0x4 - core index']
  #allocation1 [shape = 'u32[144,128]{1,0:T(1,128)}', space=vmem, size = 0x12000, scoped, tag = 'internal scratch']
  #allocation2 [shape = 'f32[8,128]{1,0:T(8,128)}', space=vmem, size = 0x1000, scoped, tag = 'scratch operand']
  #allocation3 [shape = 'f32[1,1]{1,0:T(1,128)S(6)}', space=smem, size = 0x200, scoped, tag = 'scoped memory for tpu_custom_call.1']
  %s0 = inlined_call_operand.hbm [shape: f32[2,1024], index: 0, kind: input, shape index: {}]
  %s1 = inlined_call_operand.hbm [shape: f32[1024,128], index: 1, kind: input, shape index: {}]
  %s2 = inlined_call_operand.vmem [shape: f32[1,128], index: 2, kind: input, shape index: {}]
  %s3 = inlined_call_operand.vmem [shape: f32[1,128], index: 3, kind: input, shape index: {}]
  %s4 = inlined_call_operand.<no memory space> [shape: f32[1,1], index: 4, kind: input, shape index: {}]
  %s5 = inlined_call_operand.hbm [shape: f32[1,8], index: 5, kind: output, shape index: {}]
  %s6 = sld [smem:[#allocation0]]
  $region46: #{tpu_custom_call.1} parent=0
    _
  %s8 = ssub.s32 1, %s6
  %s9 = scalar_select 0, %s8, %s6
  %10 = sst [smem:[#allocation3]] %s4
  $region1: #{tpu_custom_call.1} parent=0
    #allocation4 [shape = 'u8[32768]{0}', space=vmem, size = 0x8000, scoped, tag = 'input window, operand 0, single buffered']
    #allocation5 [shape = 's32[1]{0}', space=sflag, size = 0x4, scoped, tag = 'scoped memory for tpu_custom_call.1']
    #allocation6 [shape = 's32[1]{0}', space=sflag, size = 0x4, scoped, tag = 'scoped memory for tpu_custom_call.1']
    #allocation7 [shape = 'u8[524288]{0}', space=vmem, size = 0x80000, scoped, tag = 'input window, operand 1, single buffered']
    #allocation8 [shape = 's32[1]{0}', space=sflag, size = 0x4, scoped, tag = 'scoped memory for tpu_custom_call.1']
    #allocation9 [shape = 'u8[512]{0}', space=vmem, size = 0x400, scoped, tag = 'output window, operand 0, single buffered']
    %11 = vsyncpa [#allocation5], 0
    %12 = vsyncpa [#allocation8], 0
    %13 = vsyncpa [#allocation6], 0
    // Predicated region
    $region2: #{tpu_custom_call.1} parent=1 // pred_check
      _
    $region3: #{tpu_custom_call.1} parent=1 // pred_check_branch
      %15 = sbr.rel (0) target = $region5
    $region4: #{tpu_custom_call.1} parent=1 // pred_region
      %s17 = ssub.s32 1024, 256
      %18 = vsyncadd [#allocation5], %s17
      %s19 = sshll.u32 [#allocation4], 4
      %s20 = int_to_ptr.vmem [resolvable:$true] %s19
      %25 = dma.hbm_to_vmem [thread:$0]  %s0, 256, %s20, [#allocation5], 256, 256, 16
    $region5: #{tpu_custom_call.1} parent=1 // pred_fallthru
      _
    // Predicated region
    $region6: #{tpu_custom_call.1} parent=1 // pred_check
      _
    $region7: #{tpu_custom_call.1} parent=1 // pred_check_branch
      %27 = sbr.rel (0) target = $region9
    $region8: #{tpu_custom_call.1} parent=1 // pred_region
      %s29 = ssub.s32 16384, 16384
      %30 = vsyncadd [#allocation8], %s29
      %s31 = sshll.u32 [#allocation7], 4
      %s32 = int_to_ptr.vmem [resolvable:$true] %s31
      %37 = dma.hbm_to_vmem [thread:$0]  %s1, 16384, %s32, [#allocation8], 128, 128, 8
    $region9: #{tpu_custom_call.1} parent=1 // pred_fallthru
      _
    // Predicated region
    $region10: #{tpu_custom_call.1} parent=1 // pred_check
      _
    $region11: #{tpu_custom_call.1} parent=1 // pred_check_branch
      %39 = sbr.rel (0) target = $region13
    $region12: #{tpu_custom_call.1} parent=1 // pred_region
      _
    $region13: #{tpu_custom_call.1} parent=1 // pred_fallthru
      _
    // Predicated region
    $region14: #{tpu_custom_call.1} parent=1 // pred_check
      _
    $region15: #{tpu_custom_call.1} parent=1 // pred_check_branch
      %41 = sbr.rel (0) target = $region17
    $region16: #{tpu_custom_call.1} parent=1 // pred_region
      _
    $region17: #{tpu_custom_call.1} parent=1 // pred_fallthru
      _
    // Predicated region
    $region18: #{tpu_custom_call.1} parent=1 // pred_check
      _
    $region19: #{tpu_custom_call.1} parent=1 // pred_check_branch
      %43 = sbr.rel (0) target = $region21
    $region20: #{tpu_custom_call.1} parent=1 // pred_region
      _
    $region21: #{tpu_custom_call.1} parent=1 // pred_fallthru
      _
    // Predicated region
    $region22: #{tpu_custom_call.1} parent=1 // pred_check
      _
    $region23: #{tpu_custom_call.1} parent=1 // pred_check_branch
      %45 = sbr.rel (0) target = $region25
    $region24: #{tpu_custom_call.1} parent=1 // pred_region
      %46 = dma.done [#allocation5], 1024
    $region25: #{tpu_custom_call.1} parent=1 // pred_fallthru
      _
    // Predicated region
    $region26: #{tpu_custom_call.1} parent=1 // pred_check
      _
    $region27: #{tpu_custom_call.1} parent=1 // pred_check_branch
      %48 = sbr.rel (0) target = $region29
    $region28: #{tpu_custom_call.1} parent=1 // pred_region
      %49 = dma.done [#allocation8], 16384
    $region29: #{tpu_custom_call.1} parent=1 // pred_fallthru
      _
    %p50 = scmp.eq.s32.totalorder 0, 0
    // Predicated region
    $region30: #{tpu_custom_call.1} parent=1 // pred_check
      %p51 = pneg %p50
    $region31: #{tpu_custom_call.1} parent=1 // pred_check_branch
      %53 = sbr.rel (%p51) target = $region33
    $region32: #{tpu_custom_call.1} parent=1 // pred_region
      %54 = vst [vmem:[#allocation2] sm:$0xff] 0.0
    $region33: #{tpu_custom_call.1} parent=1 // pred_fallthru
      _
    %v55 = vld [vmem:[#allocation4] sm:$0xff]
    %v56 = vld [vmem:[#allocation4 + $0x8] sm:$0xff]
    %v57 = vld [vmem:[#allocation4 + $0x10] sm:$0xff]
    %v58 = vld [vmem:[#allocation4 + $0x18] sm:$0xff]
    %v59 = vld [vmem:[#allocation4 + $0x20] sm:$0xff]
    %v60 = vld [vmem:[#allocation4 + $0x28] sm:$0xff]
    %v61 = vld [vmem:[#allocation4 + $0x30] sm:$0xff]
    %v62 = vld [vmem:[#allocation4 + $0x38] sm:$0xff]
    %v63 = vld [vmem:[#allocation7] sm:$0xff]
    %v64 = vld [vmem:[#allocation7 + $0x8] sm:$0xff]
    %v65 = vld [vmem:[#allocation7 + $0x10] sm:$0xff]
    %v66 = vld [vmem:[#allocation7 + $0x18] sm:$0xff]
    %v67 = vld [vmem:[#allocation7 + $0x20] sm:$0xff]
    %v68 = vld [vmem:[#allocation7 + $0x28] sm:$0xff]
    %v69 = vld [vmem:[#allocation7 + $0x30] sm:$0xff]
    %v70 = vld [vmem:[#allocation7 + $0x38] sm:$0xff]
    %v71 = vld [vmem:[#allocation7 + $0x40] sm:$0xff]
    %v72 = vld [vmem:[#allocation7 + $0x48] sm:$0xff]
    %v73 = vld [vmem:[#allocation7 + $0x50] sm:$0xff]
    %v74 = vld [vmem:[#allocation7 + $0x58] sm:$0xff]
    %v75 = vld [vmem:[#allocation7 + $0x60] sm:$0xff]
    %v76 = vld [vmem:[#allocation7 + $0x68] sm:$0xff]
    %v77 = vld [vmem:[#allocation7 + $0x70] sm:$0xff]
    %v78 = vld [vmem:[#allocation7 + $0x78] sm:$0xff]
    %v79 = vld [vmem:[#allocation7 + $0x80] sm:$0xff]
    %v80 = vld [vmem:[#allocation7 + $0x88] sm:$0xff]
    %v81 = vld [vmem:[#allocation7 + $0x90] sm:$0xff]
    %v82 = vld [vmem:[#allocation7 + $0x98] sm:$0xff]
    %v83 = vld [vmem:[#allocation7 + $0xa0] sm:$0xff]
    %v84 = vld [vmem:[#allocation7 + $0xa8] sm:$0xff]
    %v85 = vld [vmem:[#allocation7 + $0xb0] sm:$0xff]
    %v86 = vld [vmem:[#allocation7 + $0xb8] sm:$0xff]
    %v87 = vld [vmem:[#allocation7 + $0xc0] sm:$0xff]
    %v88 = vld [vmem:[#allocation7 + $0xc8] sm:$0xff]
    %v89 = vld [vmem:[#allocation7 + $0xd0] sm:$0xff]
    %v90 = vld [vmem:[#allocation7 + $0xd8] sm:$0xff]
    %v91 = vld [vmem:[#allocation7 + $0xe0] sm:$0xff]
    %v92 = vld [vmem:[#allocation7 + $0xe8] sm:$0xff]
    %v93 = vld [vmem:[#allocation7 + $0xf0] sm:$0xff]
    %v94 = vld [vmem:[#allocation7 + $0xf8] sm:$0xff]
    %v95 = vld [vmem:[#allocation7 + $0x100] sm:$0xff]
    %v96 = vld [vmem:[#allocation7 + $0x108] sm:$0xff]
    %v97 = vld [vmem:[#allocation7 + $0x110] sm:$0xff]
    %v98 = vld [vmem:[#allocation7 + $0x118] sm:$0xff]
    %v99 = vld [vmem:[#allocation7 + $0x120] sm:$0xff]
    %v100 = vld [vmem:[#allocation7 + $0x128] sm:$0xff]
    %v101 = vld [vmem:[#allocation7 + $0x130] sm:$0xff]
    %v102 = vld [vmem:[#allocation7 + $0x138] sm:$0xff]
    %v103 = vld [vmem:[#allocation7 + $0x140] sm:$0xff]
    %v104 = vld [vmem:[#allocation7 + $0x148] sm:$0xff]
    %v105 = vld [vmem:[#allocation7 + $0x150] sm:$0xff]
    %v106 = vld [vmem:[#allocation7 + $0x158] sm:$0xff]
    %v107 = vld [vmem:[#allocation7 + $0x160] sm:$0xff]
    %v108 = vld [vmem:[#allocation7 + $0x168] sm:$0xff]
    %v109 = vld [vmem:[#allocation7 + $0x170] sm:$0xff]
    %v110 = vld [vmem:[#allocation7 + $0x178] sm:$0xff]
    %v111 = vld [vmem:[#allocation7 + $0x180] sm:$0xff]
    %v112 = vld [vmem:[#allocation7 + $0x188] sm:$0xff]
    %v113 = vld [vmem:[#allocation7 + $0x190] sm:$0xff]
    %v114 = vld [vmem:[#allocation7 + $0x198] sm:$0xff]
    %v115 = vld [vmem:[#allocation7 + $0x1a0] sm:$0xff]
    %v116 = vld [vmem:[#allocation7 + $0x1a8] sm:$0xff]
    %v117 = vld [vmem:[#allocation7 + $0x1b0] sm:$0xff]
    %v118 = vld [vmem:[#allocation7 + $0x1b8] sm:$0xff]
    %v119 = vld [vmem:[#allocation7 + $0x1c0] sm:$0xff]
    %v120 = vld [vmem:[#allocation7 + $0x1c8] sm:$0xff]
    %v121 = vld [vmem:[#allocation7 + $0x1d0] sm:$0xff]
    %v122 = vld [vmem:[#allocation7 + $0x1d8] sm:$0xff]
    %v123 = vld [vmem:[#allocation7 + $0x1e0] sm:$0xff]
    %v124 = vld [vmem:[#allocation7 + $0x1e8] sm:$0xff]
    %v125 = vld [vmem:[#allocation7 + $0x1f0] sm:$0xff]
    %v126 = vld [vmem:[#allocation7 + $0x1f8] sm:$0xff]
    %v127 = vld [vmem:[#allocation7 + $0x200] sm:$0xff]
    %v128 = vld [vmem:[#allocation7 + $0x208] sm:$0xff]
    %v129 = vld [vmem:[#allocation7 + $0x210] sm:$0xff]
    %v130 = vld [vmem:[#allocation7 + $0x218] sm:$0xff]
    %v131 = vld [vmem:[#allocation7 + $0x220] sm:$0xff]
    %v132 = vld [vmem:[#allocation7 + $0x228] sm:$0xff]
    %v133 = vld [vmem:[#allocation7 + $0x230] sm:$0xff]
    %v134 = vld [vmem:[#allocation7 + $0x238] sm:$0xff]
    %v135 = vld [vmem:[#allocation7 + $0x240] sm:$0xff]
    %v136 = vld [vmem:[#allocation7 + $0x248] sm:$0xff]
    %v137 = vld [vmem:[#allocation7 + $0x250] sm:$0xff]
    %v138 = vld [vmem:[#allocation7 + $0x258] sm:$0xff]
    %v139 = vld [vmem:[#allocation7 + $0x260] sm:$0xff]
    %v140 = vld [vmem:[#allocation7 + $0x268] sm:$0xff]
    %v141 = vld [vmem:[#allocation7 + $0x270] sm:$0xff]
    %v142 = vld [vmem:[#allocation7 + $0x278] sm:$0xff]
    %v143 = vld [vmem:[#allocation7 + $0x280] sm:$0xff]
    %v144 = vld [vmem:[#allocation7 + $0x288] sm:$0xff]
    %v145 = vld [vmem:[#allocation7 + $0x290] sm:$0xff]
    %v146 = vld [vmem:[#allocation7 + $0x298] sm:$0xff]
    %v147 = vld [vmem:[#allocation7 + $0x2a0] sm:$0xff]
    %v148 = vld [vmem:[#allocation7 + $0x2a8] sm:$0xff]
    %v149 = vld [vmem:[#allocation7 + $0x2b0] sm:$0xff]
    %v150 = vld [vmem:[#allocation7 + $0x2b8] sm:$0xff]
    %v151 = vld [vmem:[#allocation7 + $0x2c0] sm:$0xff]
    %v152 = vld [vmem:[#allocation7 + $0x2c8] sm:$0xff]
    %v153 = vld [vmem:[#allocation7 + $0x2d0] sm:$0xff]
    %v154 = vld [vmem:[#allocation7 + $0x2d8] sm:$0xff]
    %v155 = vld [vmem:[#allocation7 + $0x2e0] sm:$0xff]
    %v156 = vld [vmem:[#allocation7 + $0x2e8] sm:$0xff]
    %v157 = vld [vmem:[#allocation7 + $0x2f0] sm:$0xff]
    %v158 = vld [vmem:[#allocation7 + $0x2f8] sm:$0xff]
    %v159 = vld [vmem:[#allocation7 + $0x300] sm:$0xff]
    %v160 = vld [vmem:[#allocation7 + $0x308] sm:$0xff]
    %v161 = vld [vmem:[#allocation7 + $0x310] sm:$0xff]
    %v162 = vld [vmem:[#allocation7 + $0x318] sm:$0xff]
    %v163 = vld [vmem:[#allocation7 + $0x320] sm:$0xff]
    %v164 = vld [vmem:[#allocation7 + $0x328] sm:$0xff]
    %v165 = vld [vmem:[#allocation7 + $0x330] sm:$0xff]
    %v166 = vld [vmem:[#allocation7 + $0x338] sm:$0xff]
    %v167 = vld [vmem:[#allocation7 + $0x340] sm:$0xff]
    %v168 = vld [vmem:[#allocation7 + $0x348] sm:$0xff]
    %v169 = vld [vmem:[#allocation7 + $0x350] sm:$0xff]
    %v170 = vld [vmem:[#allocation7 + $0x358] sm:$0xff]
    %v171 = vld [vmem:[#allocation7 + $0x360] sm:$0xff]
    %v172 = vld [vmem:[#allocation7 + $0x368] sm:$0xff]
    %v173 = vld [vmem:[#allocation7 + $0x370] sm:$0xff]
    %v174 = vld [vmem:[#allocation7 + $0x378] sm:$0xff]
    %v175 = vld [vmem:[#allocation7 + $0x380] sm:$0xff]
    %v176 = vld [vmem:[#allocation7 + $0x388] sm:$0xff]
    %v177 = vld [vmem:[#allocation7 + $0x390] sm:$0xff]
    %v178 = vld [vmem:[#allocation7 + $0x398] sm:$0xff]
    %v179 = vld [vmem:[#allocation7 + $0x3a0] sm:$0xff]
    %v180 = vld [vmem:[#allocation7 + $0x3a8] sm:$0xff]
    %v181 = vld [vmem:[#allocation7 + $0x3b0] sm:$0xff]
    %v182 = vld [vmem:[#allocation7 + $0x3b8] sm:$0xff]
    %v183 = vld [vmem:[#allocation7 + $0x3c0] sm:$0xff]
    %v184 = vld [vmem:[#allocation7 + $0x3c8] sm:$0xff]
    %v185 = vld [vmem:[#allocation7 + $0x3d0] sm:$0xff]
    %v186 = vld [vmem:[#allocation7 + $0x3d8] sm:$0xff]
    %v187 = vld [vmem:[#allocation7 + $0x3e0] sm:$0xff]
    %v188 = vld [vmem:[#allocation7 + $0x3e8] sm:$0xff]
    %v189 = vld [vmem:[#allocation7 + $0x3f0] sm:$0xff]
    %v190 = vld [vmem:[#allocation7 + $0x3f8] sm:$0xff]
    %v191 = vld [vmem:[#allocation2] sm:$0xff]
    %v200 = vcombine.low %v55, %v57
    %v201 = vcombine.high %v55, %v57
    %v202 = vcombine.low %v59, %v61
    %v203 = vcombine.high %v59, %v61
    %v205 = vunpack.c.l.s4 1983009808
    %v206 = vunpack.c.0.s8 %v205
    %v207 = vlaneseq
    %v208 = vshrl.u32 %v207, 7
    %v209 = vsub.s32 %v206, %v208
    %v210 = vrot.slane %v200, %v209
    %v212 = vunpack.c.l.s4 1983009808
    %v213 = vunpack.c.0.s8 %v212
    %v214 = vlaneseq
    %v215 = vshrl.u32 %v214, 7
    %v216 = vsub.s32 %v213, %v215
    %v217 = vrot.slane %v201, %v216
    %v219 = vunpack.c.l.s4 1983009808
    %v220 = vunpack.c.0.s8 %v219
    %v221 = vlaneseq
    %v222 = vshrl.u32 %v221, 7
    %v223 = vsub.s32 %v220, %v222
    %v224 = vrot.slane %v202, %v223
    %v226 = vunpack.c.l.s4 1983009808
    %v227 = vunpack.c.0.s8 %v226
    %v228 = vlaneseq
    %v229 = vshrl.u32 %v228, 7
    %v230 = vsub.s32 %v227, %v229
    %v231 = vrot.slane %v203, %v230
    %v232 = vcombine.low %v210, %v224
    %v233 = vcombine.high %v210, %v224
    %v234 = vcombine.low %v217, %v231
    %v235 = vcombine.high %v217, %v231
    %v236 = vcombine.low %v56, %v58
    %v237 = vcombine.high %v56, %v58
    %v238 = vcombine.low %v60, %v62
    %v239 = vcombine.high %v60, %v62
    %v241 = vunpack.c.l.s4 1983009808
    %v242 = vunpack.c.0.s8 %v241
    %v243 = vlaneseq
    %v244 = vshrl.u32 %v243, 7
    %v245 = vsub.s32 %v242, %v244
    %v246 = vrot.slane %v236, %v245
    %v248 = vunpack.c.l.s4 1983009808
    %v249 = vunpack.c.0.s8 %v248
    %v250 = vlaneseq
    %v251 = vshrl.u32 %v250, 7
    %v252 = vsub.s32 %v249, %v251
    %v253 = vrot.slane %v237, %v252
    %v255 = vunpack.c.l.s4 1983009808
    %v256 = vunpack.c.0.s8 %v255
    %v257 = vlaneseq
    %v258 = vshrl.u32 %v257, 7
    %v259 = vsub.s32 %v256, %v258
    %v260 = vrot.slane %v238, %v259
    %v262 = vunpack.c.l.s4 1983009808
    %v263 = vunpack.c.0.s8 %v262
    %v264 = vlaneseq
    %v265 = vshrl.u32 %v264, 7
    %v266 = vsub.s32 %v263, %v265
    %v267 = vrot.slane %v239, %v266
    %v268 = vcombine.low %v246, %v260
    %v269 = vcombine.high %v246, %v260
    %v270 = vcombine.low %v253, %v267
    %v271 = vcombine.high %v253, %v267
    %280 = vmatprep.subr.mxu0 0.0
    %281 = vmatpush1.msra.mxu0 %v63
    %282 = vmatprep.subr.mxu0 0.0
    %283 = vmatpush1.msra.mxu0 %v64
    %284 = vmatprep.subr.mxu0 0.0
    %285 = vmatpush1.msra.mxu0 %v65
    %286 = vmatprep.subr.mxu0 0.0
    %287 = vmatpush1.msra.mxu0 %v66
    %288 = vmatprep.subr.mxu0 0.0
    %289 = vmatpush1.msra.mxu0 %v67
    %290 = vmatprep.subr.mxu0 0.0
    %291 = vmatpush1.msra.mxu0 %v68
    %292 = vmatprep.subr.mxu0 0.0
    %293 = vmatpush1.msra.mxu0 %v69
    %294 = vmatprep.subr.mxu0 0.0
    %295 = vmatpush1.msra.mxu0 %v70
    %296 = vmatprep.subr.mxu0 0.0
    %297 = vmatpush1.msra.mxu0 %v71
    %298 = vmatprep.subr.mxu0 0.0
    %299 = vmatpush1.msra.mxu0 %v72
    %300 = vmatprep.subr.mxu0 0.0
    %301 = vmatpush1.msra.mxu0 %v73
    %302 = vmatprep.subr.mxu0 0.0
    %303 = vmatpush1.msra.mxu0 %v74
    %304 = vmatprep.subr.mxu0 0.0
    %305 = vmatpush1.msra.mxu0 %v75
    %306 = vmatprep.subr.mxu0 0.0
    %307 = vmatpush1.msra.mxu0 %v76
    %308 = vmatprep.subr.mxu0 0.0
    %309 = vmatpush1.msra.mxu0 %v77
    %310 = vmatprep.subr.mxu0 0.0
    %311 = vmatpush1.msra.mxu0 %v78
    %312 = vmatprep.subr.mxu0 0.0
    %313 = vmatpush1.msra.mxu0 %v79
    %314 = vmatprep.subr.mxu0 0.0
    %315 = vmatpush1.msra.mxu0 %v80
    %316 = vmatprep.subr.mxu0 0.0
    %317 = vmatpush1.msra.mxu0 %v81
    %318 = vmatprep.subr.mxu0 0.0
    %319 = vmatpush1.msra.mxu0 %v82
    %320 = vmatprep.subr.mxu0 0.0
    %321 = vmatpush1.msra.mxu0 %v83
    %322 = vmatprep.subr.mxu0 0.0
    %323 = vmatpush1.msra.mxu0 %v84
    %324 = vmatprep.subr.mxu0 0.0
    %325 = vmatpush1.msra.mxu0 %v85
    %326 = vmatprep.subr.mxu0 0.0
    %327 = vmatpush1.msra.mxu0 %v86
    %328 = vmatprep.subr.mxu0 0.0
    %329 = vmatpush1.msra.mxu0 %v87
    %330 = vmatprep.subr.mxu0 0.0
    %331 = vmatpush1.msra.mxu0 %v88
    %332 = vmatprep.subr.mxu0 0.0
    %333 = vmatpush1.msra.mxu0 %v89
    %334 = vmatprep.subr.mxu0 0.0
    %335 = vmatpush1.msra.mxu0 %v90
    %336 = vmatprep.subr.mxu0 0.0
    %337 = vmatpush1.msra.mxu0 %v91
    %338 = vmatprep.subr.mxu0 0.0
    %339 = vmatpush1.msra.mxu0 %v92
    %340 = vmatprep.subr.mxu0 0.0
    %341 = vmatpush1.msra.mxu0 %v93
    %342 = vmatprep.subr.mxu0 0.0
    %343 = vmatpush1.msra.mxu0 %v94
    %344 = vmatprep.mubr.f32.mxu0 %v233
    %345 = vmatmul.mubr.f32.gmra.mrb[0].mxu0 %v232
    %v346 = vpop.f32.mrb[0].mxu0
    %v347 = vadd.f32 0.0, %v346
    %v348 = vpop.f32.mrb[0].mxu0
    %349 = vdwg.mxu0
    %350 = vmatprep.subr.mxu0 0.0
    %351 = vmatpush1.msra.mxu0 %v95
    %352 = vmatprep.subr.mxu0 0.0
    %353 = vmatpush1.msra.mxu0 %v96
    %354 = vmatprep.subr.mxu0 0.0
    %355 = vmatpush1.msra.mxu0 %v97
    %356 = vmatprep.subr.mxu0 0.0
    %357 = vmatpush1.msra.mxu0 %v98
    %358 = vmatprep.subr.mxu0 0.0
    %359 = vmatpush1.msra.mxu0 %v99
    %360 = vmatprep.subr.mxu0 0.0
    %361 = vmatpush1.msra.mxu0 %v100
    %362 = vmatprep.subr.mxu0 0.0
    %363 = vmatpush1.msra.mxu0 %v101
    %364 = vmatprep.subr.mxu0 0.0
    %365 = vmatpush1.msra.mxu0 %v102
    %366 = vmatprep.subr.mxu0 0.0
    %367 = vmatpush1.msra.mxu0 %v103
    %368 = vmatprep.subr.mxu0 0.0
    %369 = vmatpush1.msra.mxu0 %v104
    %370 = vmatprep.subr.mxu0 0.0
    %371 = vmatpush1.msra.mxu0 %v105
    %372 = vmatprep.subr.mxu0 0.0
    %373 = vmatpush1.msra.mxu0 %v106
    %374 = vmatprep.subr.mxu0 0.0
    %375 = vmatpush1.msra.mxu0 %v107
    %376 = vmatprep.subr.mxu0 0.0
    %377 = vmatpush1.msra.mxu0 %v108
    %378 = vmatprep.subr.mxu0 0.0
    %379 = vmatpush1.msra.mxu0 %v109
    %380 = vmatprep.subr.mxu0 0.0
    %381 = vmatpush1.msra.mxu0 %v110
    %382 = vmatprep.subr.mxu0 0.0
    %383 = vmatpush1.msra.mxu0 %v111
    %384 = vmatprep.subr.mxu0 0.0
    %385 = vmatpush1.msra.mxu0 %v112
    %386 = vmatprep.subr.mxu0 0.0
    %387 = vmatpush1.msra.mxu0 %v113
    %388 = vmatprep.subr.mxu0 0.0
    %389 = vmatpush1.msra.mxu0 %v114
    %390 = vmatprep.subr.mxu0 0.0
    %391 = vmatpush1.msra.mxu0 %v115
    %392 = vmatprep.subr.mxu0 0.0
    %393 = vmatpush1.msra.mxu0 %v116
    %394 = vmatprep.subr.mxu0 0.0
    %395 = vmatpush1.msra.mxu0 %v117
    %396 = vmatprep.subr.mxu0 0.0
    %397 = vmatpush1.msra.mxu0 %v118
    %398 = vmatprep.subr.mxu0 0.0
    %399 = vmatpush1.msra.mxu0 %v119
    %400 = vmatprep.subr.mxu0 0.0
    %401 = vmatpush1.msra.mxu0 %v120
    %402 = vmatprep.subr.mxu0 0.0
    %403 = vmatpush1.msra.mxu0 %v121
    %404 = vmatprep.subr.mxu0 0.0
    %405 = vmatpush1.msra.mxu0 %v122
    %406 = vmatprep.subr.mxu0 0.0
    %407 = vmatpush1.msra.mxu0 %v123
    %408 = vmatprep.subr.mxu0 0.0
    %409 = vmatpush1.msra.mxu0 %v124
    %410 = vmatprep.subr.mxu0 0.0
    %411 = vmatpush1.msra.mxu0 %v125
    %412 = vmatprep.subr.mxu0 0.0
    %413 = vmatpush1.msra.mxu0 %v126
    %414 = vmatprep.mubr.f32.mxu0 %v235
    %415 = vmatmul.mubr.f32.gmra.mrb[0].mxu0 %v234
    %v416 = vpop.f32.mrb[0].mxu0
    %v417 = vadd.f32 %v347, %v416
    %v418 = vpop.f32.mrb[0].mxu0
    %419 = vdwg.mxu0
    %420 = vmatprep.subr.mxu0 0.0
    %421 = vmatpush1.msra.mxu0 %v127
    %422 = vmatprep.subr.mxu0 0.0
    %423 = vmatpush1.msra.mxu0 %v128
    %424 = vmatprep.subr.mxu0 0.0
    %425 = vmatpush1.msra.mxu0 %v129
    %426 = vmatprep.subr.mxu0 0.0
    %427 = vmatpush1.msra.mxu0 %v130
    %428 = vmatprep.subr.mxu0 0.0
    %429 = vmatpush1.msra.mxu0 %v131
    %430 = vmatprep.subr.mxu0 0.0
    %431 = vmatpush1.msra.mxu0 %v132
    %432 = vmatprep.subr.mxu0 0.0
    %433 = vmatpush1.msra.mxu0 %v133
    %434 = vmatprep.subr.mxu0 0.0
    %435 = vmatpush1.msra.mxu0 %v134
    %436 = vmatprep.subr.mxu0 0.0
    %437 = vmatpush1.msra.mxu0 %v135
    %438 = vmatprep.subr.mxu0 0.0
    %439 = vmatpush1.msra.mxu0 %v136
    %440 = vmatprep.subr.mxu0 0.0
    %441 = vmatpush1.msra.mxu0 %v137
    %442 = vmatprep.subr.mxu0 0.0
    %443 = vmatpush1.msra.mxu0 %v138
    %444 = vmatprep.subr.mxu0 0.0
    %445 = vmatpush1.msra.mxu0 %v139
    %446 = vmatprep.subr.mxu0 0.0
    %447 = vmatpush1.msra.mxu0 %v140
    %448 = vmatprep.subr.mxu0 0.0
    %449 = vmatpush1.msra.mxu0 %v141
    %450 = vmatprep.subr.mxu0 0.0
    %451 = vmatpush1.msra.mxu0 %v142
    %452 = vmatprep.subr.mxu0 0.0
    %453 = vmatpush1.msra.mxu0 %v143
    %454 = vmatprep.subr.mxu0 0.0
    %455 = vmatpush1.msra.mxu0 %v144
    %456 = vmatprep.subr.mxu0 0.0
    %457 = vmatpush1.msra.mxu0 %v145
    %458 = vmatprep.subr.mxu0 0.0
    %459 = vmatpush1.msra.mxu0 %v146
    %460 = vmatprep.subr.mxu0 0.0
    %461 = vmatpush1.msra.mxu0 %v147
    %462 = vmatprep.subr.mxu0 0.0
    %463 = vmatpush1.msra.mxu0 %v148
    %464 = vmatprep.subr.mxu0 0.0
    %465 = vmatpush1.msra.mxu0 %v149
    %466 = vmatprep.subr.mxu0 0.0
    %467 = vmatpush1.msra.mxu0 %v150
    %468 = vmatprep.subr.mxu0 0.0
    %469 = vmatpush1.msra.mxu0 %v151
    %470 = vmatprep.subr.mxu0 0.0
    %471 = vmatpush1.msra.mxu0 %v152
    %472 = vmatprep.subr.mxu0 0.0
    %473 = vmatpush1.msra.mxu0 %v153
    %474 = vmatprep.subr.mxu0 0.0
    %475 = vmatpush1.msra.mxu0 %v154
    %476 = vmatprep.subr.mxu0 0.0
    %477 = vmatpush1.msra.mxu0 %v155
    %478 = vmatprep.subr.mxu0 0.0
    %479 = vmatpush1.msra.mxu0 %v156
    %480 = vmatprep.subr.mxu0 0.0
    %481 = vmatpush1.msra.mxu0 %v157
    %482 = vmatprep.subr.mxu0 0.0
    %483 = vmatpush1.msra.mxu0 %v158
    %484 = vmatprep.mubr.f32.mxu0 %v269
    %485 = vmatmul.mubr.f32.gmra.mrb[0].mxu0 %v268
    %v486 = vpop.f32.mrb[0].mxu0
    %v487 = vadd.f32 %v417, %v486
    %v488 = vpop.f32.mrb[0].mxu0
    %489 = vdwg.mxu0
    %490 = vmatprep.subr.mxu0 0.0
    %491 = vmatpush1.msra.mxu0 %v159
    %492 = vmatprep.subr.mxu0 0.0
    %493 = vmatpush1.msra.mxu0 %v160
    %494 = vmatprep.subr.mxu0 0.0
    %495 = vmatpush1.msra.mxu0 %v161
    %496 = vmatprep.subr.mxu0 0.0
    %497 = vmatpush1.msra.mxu0 %v162
    %498 = vmatprep.subr.mxu0 0.0
    %499 = vmatpush1.msra.mxu0 %v163
    %500 = vmatprep.subr.mxu0 0.0
    %501 = vmatpush1.msra.mxu0 %v164
    %502 = vmatprep.subr.mxu0 0.0
    %503 = vmatpush1.msra.mxu0 %v165
    %504 = vmatprep.subr.mxu0 0.0
    %505 = vmatpush1.msra.mxu0 %v166
    %506 = vmatprep.subr.mxu0 0.0
    %507 = vmatpush1.msra.mxu0 %v167
    %508 = vmatprep.subr.mxu0 0.0
    %509 = vmatpush1.msra.mxu0 %v168
    %510 = vmatprep.subr.mxu0 0.0
    %511 = vmatpush1.msra.mxu0 %v169
    %512 = vmatprep.subr.mxu0 0.0
    %513 = vmatpush1.msra.mxu0 %v170
    %514 = vmatprep.subr.mxu0 0.0
    %515 = vmatpush1.msra.mxu0 %v171
    %516 = vmatprep.subr.mxu0 0.0
    %517 = vmatpush1.msra.mxu0 %v172
    %518 = vmatprep.subr.mxu0 0.0
    %519 = vmatpush1.msra.mxu0 %v173
    %520 = vmatprep.subr.mxu0 0.0
    %521 = vmatpush1.msra.mxu0 %v174
    %522 = vmatprep.subr.mxu0 0.0
    %523 = vmatpush1.msra.mxu0 %v175
    %524 = vmatprep.subr.mxu0 0.0
    %525 = vmatpush1.msra.mxu0 %v176
    %526 = vmatprep.subr.mxu0 0.0
    %527 = vmatpush1.msra.mxu0 %v177
    %528 = vmatprep.subr.mxu0 0.0
    %529 = vmatpush1.msra.mxu0 %v178
    %530 = vmatprep.subr.mxu0 0.0
    %531 = vmatpush1.msra.mxu0 %v179
    %532 = vmatprep.subr.mxu0 0.0
    %533 = vmatpush1.msra.mxu0 %v180
    %534 = vmatprep.subr.mxu0 0.0
    %535 = vmatpush1.msra.mxu0 %v181
    %536 = vmatprep.subr.mxu0 0.0
    %537 = vmatpush1.msra.mxu0 %v182
    %538 = vmatprep.subr.mxu0 0.0
    %539 = vmatpush1.msra.mxu0 %v183
    %540 = vmatprep.subr.mxu0 0.0
    %541 = vmatpush1.msra.mxu0 %v184
    %542 = vmatprep.subr.mxu0 0.0
    %543 = vmatpush1.msra.mxu0 %v185
    %544 = vmatprep.subr.mxu0 0.0
    %545 = vmatpush1.msra.mxu0 %v186
    %546 = vmatprep.subr.mxu0 0.0
    %547 = vmatpush1.msra.mxu0 %v187
    %548 = vmatprep.subr.mxu0 0.0
    %549 = vmatpush1.msra.mxu0 %v188
    %550 = vmatprep.subr.mxu0 0.0
    %551 = vmatpush1.msra.mxu0 %v189
    %552 = vmatprep.subr.mxu0 0.0
    %553 = vmatpush1.msra.mxu0 %v190
    %554 = vmatprep.mubr.f32.mxu0 %v271
    %555 = vmatmul.mubr.f32.gmra.mrb[0].mxu0 %v270
    %v556 = vpop.f32.mrb[0].mxu0
    %v557 = vadd.f32 %v487, %v556
    %v558 = vpop.f32.mrb[0].mxu0
    %559 = vdwg.mxu0
    %v560 = vadd.f32 %v191, %v557
    %561 = vst [vmem:[#allocation2] sm:$0xff] %v560
    // Predicated region
    $region34: #{tpu_custom_call.1} parent=1 // pred_check
      %p562 = pneg %p50
    $region35: #{tpu_custom_call.1} parent=1 // pred_check_branch
      %564 = sbr.rel (%p562) target = $region37
    $region36: #{tpu_custom_call.1} parent=1 // pred_region
      %v565 = vld [vmem:[#allocation2] sm:$0xff]
      %v566 = vld [vmem:[%s2] sm:$0x1]
      %v568 = vlaneseq
      %v569 = vshrl.u32 %v568, 7
      %v570 = vsub.s32 0, %v569
      %v571 = vrot.slane %v566, %v570
      %v573 = vadd.f32 %v565, %v571
      %v574 = vmax.f32 %v573, 0.0
      %v575 = vld [vmem:[%s3] sm:$0x1]
      %s576 = sld [smem:[#allocation3]]
      %v577 = vstv %s576
      %578 = vmatprep.subr.mxu0 0.0
      %579 = vmatpush1.xpose.msra.mxu0 %v574
      %580 = vmatprep.subr.mxu0 0.0
      %581 = vmatpush1.xpose.msra.mxu0 0.0
      %582 = vmatprep.subr.mxu0 0.0
      %583 = vmatpush1.xpose.msra.mxu0 0.0
      %584 = vmatprep.subr.mxu0 0.0
      %585 = vmatpush1.xpose.msra.mxu0 0.0
      %586 = vmatprep.subr.mxu0 0.0
      %587 = vmatpush1.xpose.msra.mxu0 0.0
      %588 = vmatprep.subr.mxu0 0.0
      %589 = vmatpush1.xpose.msra.mxu0 0.0
      %590 = vmatprep.subr.mxu0 0.0
      %591 = vmatpush1.xpose.msra.mxu0 0.0
      %592 = vmatprep.subr.mxu0 0.0
      %593 = vmatpush1.xpose.msra.mxu0 0.0
      %594 = vmatprep.subr.mxu0 0.0
      %595 = vmatpush1.xpose.msra.mxu0 0.0
      %596 = vmatprep.subr.mxu0 0.0
      %597 = vmatpush1.xpose.msra.mxu0 0.0
      %598 = vmatprep.subr.mxu0 0.0
      %599 = vmatpush1.xpose.msra.mxu0 0.0
      %600 = vmatprep.subr.mxu0 0.0
      %601 = vmatpush1.xpose.msra.mxu0 0.0
      %602 = vmatprep.subr.mxu0 0.0
      %603 = vmatpush1.xpose.msra.mxu0 0.0
      %604 = vmatprep.subr.mxu0 0.0
      %605 = vmatpush1.xpose.msra.mxu0 0.0
      %606 = vmatprep.subr.mxu0 0.0
      %607 = vmatpush1.xpose.msra.mxu0 0.0
      %608 = vmatprep.subr.mxu0 0.0
      %609 = vmatpush1.xpose.msra.mxu0 0.0
      %610 = vmatprep.subr.mxu0 0.0
      %611 = vmatpush1.xpose.msra.mxu0 0.0
      %612 = vmatprep.subr.mxu0 0.0
      %613 = vmatpush1.xpose.msra.mxu0 0.0
      %614 = vmatprep.subr.mxu0 0.0
      %615 = vmatpush1.xpose.msra.mxu0 0.0
      %616 = vmatprep.subr.mxu0 0.0
      %617 = vmatpush1.xpose.msra.mxu0 0.0
      %618 = vmatprep.subr.mxu0 0.0
      %619 = vmatpush1.xpose.msra.mxu0 0.0
      %620 = vmatprep.subr.mxu0 0.0
      %621 = vmatpush1.xpose.msra.mxu0 0.0
      %622 = vmatprep.subr.mxu0 0.0
      %623 = vmatpush1.xpose.msra.mxu0 0.0
      %624 = vmatprep.subr.mxu0 0.0
      %625 = vmatpush1.xpose.msra.mxu0 0.0
      %626 = vmatprep.subr.mxu0 0.0
      %627 = vmatpush1.xpose.msra.mxu0 0.0
      %628 = vmatprep.subr.mxu0 0.0
      %629 = vmatpush1.xpose.msra.mxu0 0.0
      %630 = vmatprep.subr.mxu0 0.0
      %631 = vmatpush1.xpose.msra.mxu0 0.0
      %632 = vmatprep.subr.mxu0 0.0
      %633 = vmatpush1.xpose.msra.mxu0 0.0
      %634 = vmatprep.subr.mxu0 0.0
      %635 = vmatpush1.xpose.msra.mxu0 0.0
      %636 = vmatprep.subr.mxu0 0.0
      %637 = vmatpush1.xpose.msra.mxu0 0.0
      %638 = vmatprep.subr.mxu0 0.0
      %639 = vmatpush1.xpose.msra.mxu0 0.0
      %640 = vmatprep.subr.mxu0 0.0
      %641 = vmatpush1.xpose.msra.mxu0 0.0
      %642 = vmatprep.mubr.f32.mxu0 0.0
      %643 = vmatmul.mubr.f32.gmra.mrb[0].mxu0 %v575
      %v644 = vpop.f32.mrb[0].mxu0
      %v645 = vadd.f32 %v577, %v644
      %v646 = vpop.f32.mrb[0].mxu0
      %647 = vdwg.mxu0
      %vm648 = vcmask 57344
      %649 = vst.msk [vmem:[#allocation9] sm:$0x1] %vm648, %v645
    $region37: #{tpu_custom_call.1} parent=1 // pred_fallthru
      _
    // Predicated region
    $region38: #{tpu_custom_call.1} parent=1 // pred_check
      _
    $region39: #{tpu_custom_call.1} parent=1 // pred_check_branch
      %651 = sbr.rel (0) target = $region41
    $region40: #{tpu_custom_call.1} parent=1 // pred_region
      %s653 = ssub.s32 16, 16
      %654 = vsyncadd [#allocation6], %s653
      %s656 = sshll.u32 [#allocation9], 4
      %s657 = int_to_ptr.vmem [resolvable:$true] %s656
      %659 = dma.vmem_to_hbm [thread:$0]  %s657, 16, %s5, [#allocation6]
    $region41: #{tpu_custom_call.1} parent=1 // pred_fallthru
      _
    // Predicated region
    $region42: #{tpu_custom_call.1} parent=1 // pred_check
      _
    $region43: #{tpu_custom_call.1} parent=1 // pred_check_branch
      %661 = sbr.rel (0) target = $region45
    $region44: #{tpu_custom_call.1} parent=1 // pred_region
      %662 = dma.done [#allocation6], 16
    $region45: #{tpu_custom_call.1} parent=1 // pred_fallthru
      _
    %663 = vsyncpa [#allocation5], 1
    %664 = vsyncpa [#allocation8], 1
    %665 = vsyncpa [#allocation6], 1

</llo_original>
